<compile_context>
chip_gen: v7x
topology: tpu7x:2x2x1
jax: 0.10.0
libtpu: 0.0.40
codegen_flags: <defaults>
</compile_context>

<pallas_src>
import functools

import jax
import jax.numpy as jnp
from jax import lax
from jax.experimental import pallas as pl
from jax.experimental.pallas import tpu as pltpu

DIM = 128          # model dim (lane axis)
FF_DIM = 4 * DIM   # = 512


def _round_up(n, m):
    return (n + m - 1) // m * m


# ------------------------------ Pallas kernel --------------------------------

def _ffn_kernel(x_ref, w1_ref, b1_ref, w2_ref, b2_ref, o_ref, *, exact_gelu):
    # x_ref: (tm, D) fp32 rows; w1/w2 already bf16; biases fp32 (1, F)/(1, D).
    x = x_ref[...]
    h = jnp.dot(x.astype(jnp.bfloat16), w1_ref[...],
                preferred_element_type=jnp.float32) + b1_ref[...]
    if exact_gelu:
        # F.gelu (exact): 0.5 * h * (1 + erf(h / sqrt(2)))
        h = 0.5 * h * (1.0 + lax.erf(h * 0.7071067811865476))
    else:
        # quick_gelu: h * sigmoid(1.702 * h)
        h = h * jax.nn.sigmoid(1.702 * h)
    y = jnp.dot(h.astype(jnp.bfloat16), w2_ref[...],
                preferred_element_type=jnp.float32) + b2_ref[...]
    o_ref[...] = y


# -------------------------------- wrapper ------------------------------------

def ffn_forward(x, w1, b1, w2, b2, gelu_type='exact', block_rows=256):
    """x: (..., D) fp32; w1: (D, F); b1: (F,); w2: (F, D); b2: (D,)."""
    assert gelu_type in ('exact', 'quick')
    orig_shape = x.shape
    D = orig_shape[-1]
    F = w1.shape[1]

    # Flatten batch/seq into one sublane-aligned row axis.
    xf = x.reshape(-1, D).astype(jnp.float32)
    M = xf.shape[0]
    tm = min(block_rows, _round_up(M, 8))
    Mp = _round_up(M, tm)
    if Mp != M:
        xf = jnp.pad(xf, ((0, Mp - M), (0, 0)))

    # bf16 weights feed the MXU directly; biases stay fp32 (VPU path).
    w1b = w1.astype(jnp.bfloat16)
    w2b = w2.astype(jnp.bfloat16)
    b1f = b1.reshape(1, F).astype(jnp.float32)
    b2f = b2.reshape(1, D).astype(jnp.float32)

    kernel = functools.partial(_ffn_kernel, exact_gelu=(gelu_type == 'exact'))

    out = pl.pallas_call(
        kernel,
        out_shape=jax.ShapeDtypeStruct((Mp, D), jnp.float32),
        grid=(Mp // tm,),
        in_specs=[
            pl.BlockSpec((tm, D), lambda i: (i, 0)),    # row tile of activations
            pl.BlockSpec((D, F), lambda i: (0, 0)),     # fc1 weight (resident)
            pl.BlockSpec((1, F), lambda i: (0, 0)),     # fc1 bias
            pl.BlockSpec((F, D), lambda i: (0, 0)),     # fc2 weight (resident)
            pl.BlockSpec((1, D), lambda i: (0, 0)),     # fc2 bias
        ],
        out_specs=pl.BlockSpec((tm, D), lambda i: (i, 0)),
        compiler_params=pltpu.CompilerParams(
            dimension_semantics=("parallel",)),
    )(xf, w1b, b1f, w2b, b2f)

    return out[:M].reshape(orig_shape)


# --------------------------- pure-JAX reference -------------------------------

def ffn_reference(x, w1, b1, w2, b2, gelu_type='exact'):
    h = x @ w1 + b1
    if gelu_type == 'exact':
        h = 0.5 * h * (1.0 + lax.erf(h / jnp.sqrt(2.0)))
    else:
        h = h * jax.nn.sigmoid(1.702 * h)
    return h @ w2 + b2


# ----------------------------------- main -------------------------------------

if __name__ == "__main__":
    key = jax.random.PRNGKey(0)
    kx, k1, kb1, k2, kb2 = jax.random.split(key, 5)

    B, N = 2, 16                                        # rows = B*N = 32 (÷8)
    x = jax.random.normal(kx, (B, N, DIM), jnp.float32)
    w1 = jax.random.normal(k1, (DIM, FF_DIM), jnp.float32) * 0.02
    b1 = jax.random.normal(kb1, (FF_DIM,), jnp.float32) * 0.02
    w2 = jax.random.normal(k2, (FF_DIM, DIM), jnp.float32) * 0.02
    b2 = jax.random.normal(kb2, (DIM,), jnp.float32) * 0.02

    for gelu_type in ('exact', 'quick'):
        out = jax.block_until_ready(
            ffn_forward(x, w1, b1, w2, b2, gelu_type=gelu_type))
        assert out.shape == (B, N, DIM)
        ref = ffn_reference(x, w1, b1, w2, b2, gelu_type=gelu_type)
        err = float(jnp.max(jnp.abs(out - ref)))
        # Tolerance accounts for bf16 MXU inputs (fp32 accumulation).
        assert jnp.allclose(out, ref, atol=1e-2, rtol=1e-2), \
            f"{gelu_type}: max abs err {err}"

    print("KERNEL_OK")
</pallas_src>

<mosaic_0001>
module attributes {stable_mosaic.version = 11 : i64} {
  func.func @_ffn_kernel(%arg0: i32, %arg1: memref<32x128xf32, #tpu.memory_space<vmem>>, %arg2: memref<128x512xbf16, #tpu.memory_space<vmem>>, %arg3: memref<1x512xf32, #tpu.memory_space<vmem>>, %arg4: memref<512x128xbf16, #tpu.memory_space<vmem>>, %arg5: memref<1x128xf32, #tpu.memory_space<vmem>>, %arg6: memref<32x128xf32, #tpu.memory_space<vmem>>) attributes {dimension_semantics = [#tpu.dimension_semantics<parallel>], iteration_bounds = array<i64: 1>, scalar_prefetch = 0 : i64, scratch_operands = 0 : i64, tpu.core_type = #tpu.core_type<tc>, window_params = [{transform_indices = @transform_0, window_bounds = array<i64: 32, 128>}, {pipeline_mode = #tpu.pipeline_mode<synchronous>, transform_indices = @transform_1, window_bounds = array<i64: 128, 512>}, {pipeline_mode = #tpu.pipeline_mode<synchronous>, transform_indices = @transform_2, window_bounds = array<i64: 1, 512>}, {pipeline_mode = #tpu.pipeline_mode<synchronous>, transform_indices = @transform_3, window_bounds = array<i64: 512, 128>}, {pipeline_mode = #tpu.pipeline_mode<synchronous>, transform_indices = @transform_4, window_bounds = array<i64: 1, 128>}, {transform_indices = @transform_5, window_bounds = array<i64: 32, 128>}]} {
    %c0 = arith.constant 0 : index
    %c0_0 = arith.constant 0 : index
    %0 = vector.load %arg1[%c0, %c0_0] : memref<32x128xf32, #tpu.memory_space<vmem>>, vector<32x128xf32>
    %1 = arith.truncf %0 : vector<32x128xf32> to vector<32x128xbf16>
    %c0_1 = arith.constant 0 : index
    %c0_2 = arith.constant 0 : index
    %2 = vector.load %arg2[%c0_1, %c0_2] : memref<128x512xbf16, #tpu.memory_space<vmem>>, vector<128x512xbf16>
    %cst = arith.constant dense<0.000000e+00> : vector<32x512xf32>
    %3 = tpu.matmul %1, %2, %cst {dimension_numbers = #tpu.dot_dimension_numbers<[1], [0], [0], [1], [0, 0, 1, 1], [], []>} : vector<32x128xbf16>, vector<128x512xbf16>, vector<32x512xf32> -> vector<32x512xf32>
    %c0_3 = arith.constant 0 : index
    %c0_4 = arith.constant 0 : index
    %4 = vector.load %arg3[%c0_3, %c0_4] : memref<1x512xf32, #tpu.memory_space<vmem>>, vector<1x512xf32>
    %5 = vector.broadcast %4 : vector<1x512xf32> to vector<32x512xf32>
    %6 = arith.addf %3, %5 : vector<32x512xf32>
    %cst_5 = arith.constant 5.000000e-01 : f32
    %7 = vector.broadcast %cst_5 : f32 to vector<32x512xf32>
    %8 = arith.mulf %7, %6 : vector<32x512xf32>
    %cst_6 = arith.constant 0.707106769 : f32
    %9 = vector.broadcast %cst_6 : f32 to vector<32x512xf32>
    %10 = arith.mulf %6, %9 : vector<32x512xf32>
    %11 = math.erf %10 : vector<32x512xf32>
    %cst_7 = arith.constant 1.000000e+00 : f32
    %12 = vector.broadcast %cst_7 : f32 to vector<32x512xf32>
    %13 = arith.addf %12, %11 : vector<32x512xf32>
    %14 = arith.mulf %8, %13 : vector<32x512xf32>
    %15 = arith.truncf %14 : vector<32x512xf32> to vector<32x512xbf16>
    %c0_8 = arith.constant 0 : index
    %c0_9 = arith.constant 0 : index
    %16 = vector.load %arg4[%c0_8, %c0_9] : memref<512x128xbf16, #tpu.memory_space<vmem>>, vector<512x128xbf16>
    %cst_10 = arith.constant dense<0.000000e+00> : vector<32x128xf32>
    %17 = tpu.matmul %15, %16, %cst_10 {dimension_numbers = #tpu.dot_dimension_numbers<[1], [0], [0], [1], [0, 0, 1, 1], [], []>} : vector<32x512xbf16>, vector<512x128xbf16>, vector<32x128xf32> -> vector<32x128xf32>
    %c0_11 = arith.constant 0 : index
    %c0_12 = arith.constant 0 : index
    %18 = vector.load %arg5[%c0_11, %c0_12] : memref<1x128xf32, #tpu.memory_space<vmem>>, vector<1x128xf32>
    %19 = vector.broadcast %18 : vector<1x128xf32> to vector<32x128xf32>
    %20 = arith.addf %17, %19 : vector<32x128xf32>
    %c0_13 = arith.constant 0 : index
    %c0_14 = arith.constant 0 : index
    %21 = vector.load %arg6[%c0_13, %c0_14] : memref<32x128xf32, #tpu.memory_space<vmem>>, vector<32x128xf32>
    tpu.vector_store %arg6[%c0_13, %c0_14], %20 {strides = array<i32>} : memref<32x128xf32, #tpu.memory_space<vmem>>, vector<32x128xf32>,
    return
  }
  func.func @transform_0(%arg0: i32) -> (i32, i32) {
    %c0_i32 = arith.constant 0 : i32
    %c0_i32_0 = arith.constant 0 : i32
    return %arg0, %c0_i32 : i32, i32
  }
  func.func @transform_1(%arg0: i32) -> (i32, i32) {
    %c0_i32 = arith.constant 0 : i32
    %c0_i32_0 = arith.constant 0 : i32
    %c0_i32_1 = arith.constant 0 : i32
    return %c0_i32, %c0_i32_0 : i32, i32
  }
  func.func @transform_2(%arg0: i32) -> (i32, i32) {
    %c0_i32 = arith.constant 0 : i32
    %c0_i32_0 = arith.constant 0 : i32
    %c0_i32_1 = arith.constant 0 : i32
    return %c0_i32, %c0_i32_0 : i32, i32
  }
  func.func @transform_3(%arg0: i32) -> (i32, i32) {
    %c0_i32 = arith.constant 0 : i32
    %c0_i32_0 = arith.constant 0 : i32
    %c0_i32_1 = arith.constant 0 : i32
    return %c0_i32, %c0_i32_0 : i32, i32
  }
  func.func @transform_4(%arg0: i32) -> (i32, i32) {
    %c0_i32 = arith.constant 0 : i32
    %c0_i32_0 = arith.constant 0 : i32
    %c0_i32_1 = arith.constant 0 : i32
    return %c0_i32, %c0_i32_0 : i32, i32
  }
  func.func @transform_5(%arg0: i32) -> (i32, i32) {
    %c0_i32 = arith.constant 0 : i32
    %c0_i32_0 = arith.constant 0 : i32
    return %arg0, %c0_i32 : i32, i32
  }
}

</mosaic_0001>

<llo_original>
// kernel: tpu_custom_call.1
$region0: #{tpu_custom_call.1}
  #allocation0 [shape = 'u32[]', space=smem, size = 0x4, offset = 0x4, fixed_abs, tag = 'smem constant byte address 0x4 - core index']
  #allocation1 [shape = 'u32[144,128]{1,0:T(1,128)}', space=vmem, size = 0x12000, scoped, tag = 'internal scratch']
  %s0 = inlined_call_operand.hbm [shape: f32[32,128], index: 0, kind: input, shape index: {}]
  %s1 = inlined_call_operand.hbm [shape: bf16[128,512], index: 1, kind: input, shape index: {}]
  %s2 = inlined_call_operand.vmem [shape: f32[1,512], index: 2, kind: input, shape index: {}]
  %s3 = inlined_call_operand.hbm [shape: bf16[512,128], index: 3, kind: input, shape index: {}]
  %s4 = inlined_call_operand.vmem [shape: f32[1,128], index: 4, kind: input, shape index: {}]
  %s5 = inlined_call_operand.hbm [shape: f32[32,128], index: 5, kind: output, shape index: {}]
  %s6 = sld [smem:[#allocation0]]
  $region42: #{tpu_custom_call.1} parent=0
    _
  %s8 = ssub.s32 1, %s6
  %s9 = scalar_select 0, %s8, %s6
  $region1: #{tpu_custom_call.1} parent=0
    #allocation2 [shape = 'u8[16384]{0}', space=vmem, size = 0x4000, scoped, tag = 'input window, operand 0, single buffered']
    #allocation3 [shape = 's32[1]{0}', space=sflag, size = 0x4, scoped, tag = 'scoped memory for tpu_custom_call.1']
    #allocation4 [shape = 's32[1]{0}', space=sflag, size = 0x4, scoped, tag = 'scoped memory for tpu_custom_call.1']
    #allocation5 [shape = 'u8[131072]{0}', space=vmem, size = 0x20000, scoped, tag = 'input window, operand 1, single buffered']
    #allocation6 [shape = 's32[1]{0}', space=sflag, size = 0x4, scoped, tag = 'scoped memory for tpu_custom_call.1']
    #allocation7 [shape = 'u8[131072]{0}', space=vmem, size = 0x20000, scoped, tag = 'input window, operand 3, single buffered']
    #allocation8 [shape = 'u8[16384]{0}', space=vmem, size = 0x4000, scoped, tag = 'output window, operand 0, single buffered']
    %10 = vsyncpa [#allocation3], 0
    %11 = vsyncpa [#allocation6], 0
    %12 = vsyncpa [#allocation4], 0
    // Predicated region
    $region2: #{tpu_custom_call.1} parent=1 // pred_check
      _
    $region3: #{tpu_custom_call.1} parent=1 // pred_check_branch
      %14 = sbr.rel (0) target = $region5
    $region4: #{tpu_custom_call.1} parent=1 // pred_region
      %s16 = ssub.s32 512, 512
      %17 = vsyncadd [#allocation3], %s16
      %s18 = sshll.u32 [#allocation2], 4
      %s19 = int_to_ptr.vmem [resolvable:$true] %s18
      %24 = dma.hbm_to_vmem [thread:$0]  %s0, 512, %s19, [#allocation3], 128, 128, 8
    $region5: #{tpu_custom_call.1} parent=1 // pred_fallthru
      _
    // Predicated region
    $region6: #{tpu_custom_call.1} parent=1 // pred_check
      _
    $region7: #{tpu_custom_call.1} parent=1 // pred_check_branch
      %26 = sbr.rel (0) target = $region9
    $region8: #{tpu_custom_call.1} parent=1 // pred_region
      %s28 = ssub.s32 4096, 4096
      %29 = vsyncadd [#allocation6], %s28
      %s30 = sshll.u32 [#allocation5], 4
      %s31 = int_to_ptr.vmem [resolvable:$true] %s30
      %36 = dma.hbm_to_vmem [thread:$0]  %s1, 4096, %s31, [#allocation6], 256, 256, 16
    $region9: #{tpu_custom_call.1} parent=1 // pred_fallthru
      _
    // Predicated region
    $region10: #{tpu_custom_call.1} parent=1 // pred_check
      _
    $region11: #{tpu_custom_call.1} parent=1 // pred_check_branch
      %38 = sbr.rel (0) target = $region13
    $region12: #{tpu_custom_call.1} parent=1 // pred_region
      _
    $region13: #{tpu_custom_call.1} parent=1 // pred_fallthru
      _
    // Predicated region
    $region14: #{tpu_custom_call.1} parent=1 // pred_check
      _
    $region15: #{tpu_custom_call.1} parent=1 // pred_check_branch
      %40 = sbr.rel (0) target = $region17
    $region16: #{tpu_custom_call.1} parent=1 // pred_region
      %s42 = ssub.s32 4096, 4096
      %43 = vsyncadd [#allocation6], %s42
      %s44 = sshll.u32 [#allocation7], 4
      %s45 = int_to_ptr.vmem [resolvable:$true] %s44
      %50 = dma.hbm_to_vmem [thread:$0]  %s3, 4096, %s45, [#allocation6], 64, 64, 4
    $region17: #{tpu_custom_call.1} parent=1 // pred_fallthru
      _
    // Predicated region
    $region18: #{tpu_custom_call.1} parent=1 // pred_check
      _
    $region19: #{tpu_custom_call.1} parent=1 // pred_check_branch
      %52 = sbr.rel (0) target = $region21
    $region20: #{tpu_custom_call.1} parent=1 // pred_region
      _
    $region21: #{tpu_custom_call.1} parent=1 // pred_fallthru
      _
    // Predicated region
    $region22: #{tpu_custom_call.1} parent=1 // pred_check
      _
    $region23: #{tpu_custom_call.1} parent=1 // pred_check_branch
      %54 = sbr.rel (0) target = $region25
    $region24: #{tpu_custom_call.1} parent=1 // pred_region
      %55 = dma.done [#allocation3], 512
    $region25: #{tpu_custom_call.1} parent=1 // pred_fallthru
      _
    // Predicated region
    $region26: #{tpu_custom_call.1} parent=1 // pred_check
      _
    $region27: #{tpu_custom_call.1} parent=1 // pred_check_branch
      %57 = sbr.rel (0) target = $region29
    $region28: #{tpu_custom_call.1} parent=1 // pred_region
      %58 = dma.done [#allocation6], 4096
    $region29: #{tpu_custom_call.1} parent=1 // pred_fallthru
      _
    // Predicated region
    $region30: #{tpu_custom_call.1} parent=1 // pred_check
      _
    $region31: #{tpu_custom_call.1} parent=1 // pred_check_branch
      %60 = sbr.rel (0) target = $region33
    $region32: #{tpu_custom_call.1} parent=1 // pred_region
      %61 = dma.done [#allocation6], 4096
    $region33: #{tpu_custom_call.1} parent=1 // pred_fallthru
      _
    %v63 = vld [vmem:[#allocation2] sm:$0xff]
    %v64 = vld [vmem:[#allocation2 + $0x8] sm:$0xff]
    %v65 = vld [vmem:[#allocation2 + $0x10] sm:$0xff]
    %v66 = vld [vmem:[#allocation2 + $0x18] sm:$0xff]
    %v67 = vpack.c.bf16 %v64, %v63
    %v68 = vpack.c.bf16 %v66, %v65
    %v69 = vld [vmem:[#allocation5] sm:$0xff]
    %v70 = vld [vmem:[#allocation5 + $0x8] sm:$0xff]
    %v71 = vld [vmem:[#allocation5 + $0x10] sm:$0xff]
    %v72 = vld [vmem:[#allocation5 + $0x18] sm:$0xff]
    %v73 = vld [vmem:[#allocation5 + $0x20] sm:$0xff]
    %v74 = vld [vmem:[#allocation5 + $0x28] sm:$0xff]
    %v75 = vld [vmem:[#allocation5 + $0x30] sm:$0xff]
    %v76 = vld [vmem:[#allocation5 + $0x38] sm:$0xff]
    %v77 = vld [vmem:[#allocation5 + $0x40] sm:$0xff]
    %v78 = vld [vmem:[#allocation5 + $0x48] sm:$0xff]
    %v79 = vld [vmem:[#allocation5 + $0x50] sm:$0xff]
    %v80 = vld [vmem:[#allocation5 + $0x58] sm:$0xff]
    %v81 = vld [vmem:[#allocation5 + $0x60] sm:$0xff]
    %v82 = vld [vmem:[#allocation5 + $0x68] sm:$0xff]
    %v83 = vld [vmem:[#allocation5 + $0x70] sm:$0xff]
    %v84 = vld [vmem:[#allocation5 + $0x78] sm:$0xff]
    %v85 = vld [vmem:[#allocation5 + $0x80] sm:$0xff]
    %v86 = vld [vmem:[#allocation5 + $0x88] sm:$0xff]
    %v87 = vld [vmem:[#allocation5 + $0x90] sm:$0xff]
    %v88 = vld [vmem:[#allocation5 + $0x98] sm:$0xff]
    %v89 = vld [vmem:[#allocation5 + $0xa0] sm:$0xff]
    %v90 = vld [vmem:[#allocation5 + $0xa8] sm:$0xff]
    %v91 = vld [vmem:[#allocation5 + $0xb0] sm:$0xff]
    %v92 = vld [vmem:[#allocation5 + $0xb8] sm:$0xff]
    %v93 = vld [vmem:[#allocation5 + $0xc0] sm:$0xff]
    %v94 = vld [vmem:[#allocation5 + $0xc8] sm:$0xff]
    %v95 = vld [vmem:[#allocation5 + $0xd0] sm:$0xff]
    %v96 = vld [vmem:[#allocation5 + $0xd8] sm:$0xff]
    %v97 = vld [vmem:[#allocation5 + $0xe0] sm:$0xff]
    %v98 = vld [vmem:[#allocation5 + $0xe8] sm:$0xff]
    %v99 = vld [vmem:[#allocation5 + $0xf0] sm:$0xff]
    %v100 = vld [vmem:[#allocation5 + $0xf8] sm:$0xff]
    %v101 = vld [vmem:[%s2] sm:$0xf]
    %v103 = vlaneseq
    %v104 = vshrl.u32 %v103, 7
    %v105 = vsub.s32 0, %v104
    %v106 = vrot.slane %v101, %v105
    %v107 = vlaneseq
    %v108 = vshrl.u32 %v107, 7
    %v109 = vsub.s32 1, %v108
    %v110 = vrot.slane %v101, %v109
    %v111 = vlaneseq
    %v112 = vshrl.u32 %v111, 7
    %v113 = vsub.s32 2, %v112
    %v114 = vrot.slane %v101, %v113
    %v115 = vlaneseq
    %v116 = vshrl.u32 %v115, 7
    %v117 = vsub.s32 3, %v116
    %v118 = vrot.slane %v101, %v117
    %v155 = vunpack.c.l.b16 %v69
    %v156 = vunpack.c.h.b16 %v69
    %v157 = vunpack.c.l.b16 %v70
    %v158 = vunpack.c.h.b16 %v70
    %v159 = vunpack.c.l.b16 %v71
    %v160 = vunpack.c.h.b16 %v71
    %v161 = vunpack.c.l.b16 %v72
    %v162 = vunpack.c.h.b16 %v72
    %v163 = vunpack.c.l.b16 %v73
    %v164 = vunpack.c.h.b16 %v73
    %v165 = vunpack.c.l.b16 %v74
    %v166 = vunpack.c.h.b16 %v74
    %v167 = vunpack.c.l.b16 %v75
    %v168 = vunpack.c.h.b16 %v75
    %v169 = vunpack.c.l.b16 %v76
    %v170 = vunpack.c.h.b16 %v76
    %v171 = vunpack.c.l.b16 %v77
    %v172 = vunpack.c.h.b16 %v77
    %v173 = vunpack.c.l.b16 %v78
    %v174 = vunpack.c.h.b16 %v78
    %v175 = vunpack.c.l.b16 %v79
    %v176 = vunpack.c.h.b16 %v79
    %v177 = vunpack.c.l.b16 %v80
    %v178 = vunpack.c.h.b16 %v80
    %v179 = vunpack.c.l.b16 %v81
    %v180 = vunpack.c.h.b16 %v81
    %v181 = vunpack.c.l.b16 %v82
    %v182 = vunpack.c.h.b16 %v82
    %v183 = vunpack.c.l.b16 %v83
    %v184 = vunpack.c.h.b16 %v83
    %v185 = vunpack.c.l.b16 %v84
    %v186 = vunpack.c.h.b16 %v84
    %v187 = vunpack.c.l.b16 %v85
    %v188 = vunpack.c.h.b16 %v85
    %v189 = vunpack.c.l.b16 %v86
    %v190 = vunpack.c.h.b16 %v86
    %v191 = vunpack.c.l.b16 %v87
    %v192 = vunpack.c.h.b16 %v87
    %v193 = vunpack.c.l.b16 %v88
    %v194 = vunpack.c.h.b16 %v88
    %v195 = vunpack.c.l.b16 %v89
    %v196 = vunpack.c.h.b16 %v89
    %v197 = vunpack.c.l.b16 %v90
    %v198 = vunpack.c.h.b16 %v90
    %v199 = vunpack.c.l.b16 %v91
    %v200 = vunpack.c.h.b16 %v91
    %v201 = vunpack.c.l.b16 %v92
    %v202 = vunpack.c.h.b16 %v92
    %v203 = vunpack.c.l.b16 %v93
    %v204 = vunpack.c.h.b16 %v93
    %v205 = vunpack.c.l.b16 %v94
    %v206 = vunpack.c.h.b16 %v94
    %v207 = vunpack.c.l.b16 %v95
    %v208 = vunpack.c.h.b16 %v95
    %v209 = vunpack.c.l.b16 %v96
    %v210 = vunpack.c.h.b16 %v96
    %v211 = vunpack.c.l.b16 %v97
    %v212 = vunpack.c.h.b16 %v97
    %v213 = vunpack.c.l.b16 %v98
    %v214 = vunpack.c.h.b16 %v98
    %v215 = vunpack.c.l.b16 %v99
    %v216 = vunpack.c.h.b16 %v99
    %v217 = vunpack.c.l.b16 %v100
    %v218 = vunpack.c.h.b16 %v100
    %v219 = vpack.c.b16 %v159, %v155
    %v220 = vpack.c.b16 %v160, %v156
    %v221 = vpack.c.b16 %v161, %v157
    %v222 = vpack.c.b16 %v162, %v158
    %v223 = vpack.c.b16 %v167, %v163
    %v224 = vpack.c.b16 %v168, %v164
    %v225 = vpack.c.b16 %v169, %v165
    %v226 = vpack.c.b16 %v170, %v166
    %v227 = vpack.c.b16 %v175, %v171
    %v228 = vpack.c.b16 %v176, %v172
    %v229 = vpack.c.b16 %v177, %v173
    %v230 = vpack.c.b16 %v178, %v174
    %v231 = vpack.c.b16 %v183, %v179
    %v232 = vpack.c.b16 %v184, %v180
    %v233 = vpack.c.b16 %v185, %v181
    %v234 = vpack.c.b16 %v186, %v182
    %v235 = vpack.c.b16 %v191, %v187
    %v236 = vpack.c.b16 %v192, %v188
    %v237 = vpack.c.b16 %v193, %v189
    %v238 = vpack.c.b16 %v194, %v190
    %v239 = vpack.c.b16 %v199, %v195
    %v240 = vpack.c.b16 %v200, %v196
    %v241 = vpack.c.b16 %v201, %v197
    %v242 = vpack.c.b16 %v202, %v198
    %v243 = vpack.c.b16 %v207, %v203
    %v244 = vpack.c.b16 %v208, %v204
    %v245 = vpack.c.b16 %v209, %v205
    %v246 = vpack.c.b16 %v210, %v206
    %v247 = vpack.c.b16 %v215, %v211
    %v248 = vpack.c.b16 %v216, %v212
    %v249 = vpack.c.b16 %v217, %v213
    %v250 = vpack.c.b16 %v218, %v214
    %283 = vmatprep.subr.bf16.mxu0 %v220
    %284 = vmatpush1.bf16.msra.mxu0 %v219
    %285 = vmatprep.subr.bf16.mxu0 %v224
    %286 = vmatpush1.bf16.msra.mxu0 %v223
    %287 = vmatprep.subr.bf16.mxu0 %v228
    %288 = vmatpush1.bf16.msra.mxu0 %v227
    %289 = vmatprep.subr.bf16.mxu0 %v232
    %290 = vmatpush1.bf16.msra.mxu0 %v231
    %291 = vmatprep.subr.bf16.mxu0 %v236
    %292 = vmatpush1.bf16.msra.mxu0 %v235
    %293 = vmatprep.subr.bf16.mxu0 %v240
    %294 = vmatpush1.bf16.msra.mxu0 %v239
    %295 = vmatprep.subr.bf16.mxu0 %v244
    %296 = vmatpush1.bf16.msra.mxu0 %v243
    %297 = vmatprep.subr.bf16.mxu0 %v248
    %298 = vmatpush1.bf16.msra.mxu0 %v247
    %299 = vmatprep.subr.bf16.mxu0 0
    %300 = vmatpush1.bf16.msra.mxu0 0
    %301 = vmatprep.subr.bf16.mxu0 0
    %302 = vmatpush1.bf16.msra.mxu0 0
    %303 = vmatprep.subr.bf16.mxu0 0
    %304 = vmatpush1.bf16.msra.mxu0 0
    %305 = vmatprep.subr.bf16.mxu0 0
    %306 = vmatpush1.bf16.msra.mxu0 0
    %307 = vmatprep.subr.bf16.mxu0 0
    %308 = vmatpush1.bf16.msra.mxu0 0
    %309 = vmatprep.subr.bf16.mxu0 0
    %310 = vmatpush1.bf16.msra.mxu0 0
    %311 = vmatprep.subr.bf16.mxu0 0
    %312 = vmatpush1.bf16.msra.mxu0 0
    %313 = vmatprep.subr.bf16.mxu0 0
    %314 = vmatpush1.bf16.msra.mxu0 0
    %315 = vmatprep.mubr.bf16.mxu0 0
    %316 = vmatmul.mubr.bf16.gmra.mrb[0].mxu0 %v67
    %v317 = vpop.f32.mrb[0].mxu0
    %v318 = vadd.f32 %v106, %v317
    %v319 = vpop.f32.mrb[0].mxu0
    %v320 = vadd.f32 %v110, %v319
    %v321 = vpop.f32.mrb[0].mxu0
    %v322 = vadd.f32 %v106, %v321
    %v323 = vpop.f32.mrb[0].mxu0
    %v324 = vadd.f32 %v110, %v323
    %325 = vmatprep.mubr.bf16.mxu0 0
    %326 = vmatmul.mubr.bf16.gmra.mrb[0].mxu0 %v68
    %v327 = vpop.f32.mrb[0].mxu0
    %v328 = vadd.f32 %v106, %v327
    %v329 = vpop.f32.mrb[0].mxu0
    %v330 = vadd.f32 %v110, %v329
    %v331 = vpop.f32.mrb[0].mxu0
    %v332 = vadd.f32 %v106, %v331
    %v333 = vpop.f32.mrb[0].mxu0
    %v334 = vadd.f32 %v110, %v333
    %335 = vdwg.mxu0
    %336 = vmatprep.subr.bf16.mxu0 %v222
    %337 = vmatpush1.bf16.msra.mxu0 %v221
    %338 = vmatprep.subr.bf16.mxu0 %v226
    %339 = vmatpush1.bf16.msra.mxu0 %v225
    %340 = vmatprep.subr.bf16.mxu0 %v230
    %341 = vmatpush1.bf16.msra.mxu0 %v229
    %342 = vmatprep.subr.bf16.mxu0 %v234
    %343 = vmatpush1.bf16.msra.mxu0 %v233
    %344 = vmatprep.subr.bf16.mxu0 %v238
    %345 = vmatpush1.bf16.msra.mxu0 %v237
    %346 = vmatprep.subr.bf16.mxu0 %v242
    %347 = vmatpush1.bf16.msra.mxu0 %v241
    %348 = vmatprep.subr.bf16.mxu0 %v246
    %349 = vmatpush1.bf16.msra.mxu0 %v245
    %350 = vmatprep.subr.bf16.mxu0 %v250
    %351 = vmatpush1.bf16.msra.mxu0 %v249
    %352 = vmatprep.subr.bf16.mxu0 0
    %353 = vmatpush1.bf16.msra.mxu0 0
    %354 = vmatprep.subr.bf16.mxu0 0
    %355 = vmatpush1.bf16.msra.mxu0 0
    %356 = vmatprep.subr.bf16.mxu0 0
    %357 = vmatpush1.bf16.msra.mxu0 0
    %358 = vmatprep.subr.bf16.mxu0 0
    %359 = vmatpush1.bf16.msra.mxu0 0
    %360 = vmatprep.subr.bf16.mxu0 0
    %361 = vmatpush1.bf16.msra.mxu0 0
    %362 = vmatprep.subr.bf16.mxu0 0
    %363 = vmatpush1.bf16.msra.mxu0 0
    %364 = vmatprep.subr.bf16.mxu0 0
    %365 = vmatpush1.bf16.msra.mxu0 0
    %366 = vmatprep.subr.bf16.mxu0 0
    %367 = vmatpush1.bf16.msra.mxu0 0
    %368 = vmatprep.mubr.bf16.mxu0 0
    %369 = vmatmul.mubr.bf16.gmra.mrb[0].mxu0 %v67
    %v370 = vpop.f32.mrb[0].mxu0
    %v371 = vadd.f32 %v114, %v370
    %v372 = vpop.f32.mrb[0].mxu0
    %v373 = vadd.f32 %v118, %v372
    %v374 = vpop.f32.mrb[0].mxu0
    %v375 = vadd.f32 %v114, %v374
    %v376 = vpop.f32.mrb[0].mxu0
    %v377 = vadd.f32 %v118, %v376
    %378 = vmatprep.mubr.bf16.mxu0 0
    %379 = vmatmul.mubr.bf16.gmra.mrb[0].mxu0 %v68
    %v380 = vpop.f32.mrb[0].mxu0
    %v381 = vadd.f32 %v114, %v380
    %v382 = vpop.f32.mrb[0].mxu0
    %v383 = vadd.f32 %v118, %v382
    %v384 = vpop.f32.mrb[0].mxu0
    %v385 = vadd.f32 %v114, %v384
    %v386 = vpop.f32.mrb[0].mxu0
    %v387 = vadd.f32 %v118, %v386
    %388 = vdwg.mxu0
    %v389 = vmul.f32 %v318, 0.5
    %v390 = vmul.f32 %v320, 0.5
    %v391 = vmul.f32 %v371, 0.5
    %v392 = vmul.f32 %v373, 0.5
    %v393 = vmul.f32 %v322, 0.5
    %v394 = vmul.f32 %v324, 0.5
    %v395 = vmul.f32 %v375, 0.5
    %v396 = vmul.f32 %v377, 0.5
    %v397 = vmul.f32 %v328, 0.5
    %v398 = vmul.f32 %v330, 0.5
    %v399 = vmul.f32 %v381, 0.5
    %v400 = vmul.f32 %v383, 0.5
    %v401 = vmul.f32 %v332, 0.5
    %v402 = vmul.f32 %v334, 0.5
    %v403 = vmul.f32 %v385, 0.5
    %v404 = vmul.f32 %v387, 0.5
    %v405 = vmul.f32 %v318, 0.70710677
    %v406 = vmul.f32 %v320, 0.70710677
    %v407 = vmul.f32 %v371, 0.70710677
    %v408 = vmul.f32 %v373, 0.70710677
    %v409 = vmul.f32 %v322, 0.70710677
    %v410 = vmul.f32 %v324, 0.70710677
    %v411 = vmul.f32 %v375, 0.70710677
    %v412 = vmul.f32 %v377, 0.70710677
    %v413 = vmul.f32 %v328, 0.70710677
    %v414 = vmul.f32 %v330, 0.70710677
    %v415 = vmul.f32 %v381, 0.70710677
    %v416 = vmul.f32 %v383, 0.70710677
    %v417 = vmul.f32 %v332, 0.70710677
    %v418 = vmul.f32 %v334, 0.70710677
    %v419 = vmul.f32 %v385, 0.70710677
    %v420 = vmul.f32 %v387, 0.70710677
    %v421 = verf.f32.pop %v405
    %v422 = verf.f32.pop %v406
    %v423 = verf.f32.pop %v407
    %v424 = verf.f32.pop %v408
    %v425 = verf.f32.pop %v409
    %v426 = verf.f32.pop %v410
    %v427 = verf.f32.pop %v411
    %v428 = verf.f32.pop %v412
    %v429 = verf.f32.pop %v413
    %v430 = verf.f32.pop %v414
    %v431 = verf.f32.pop %v415
    %v432 = verf.f32.pop %v416
    %v433 = verf.f32.pop %v417
    %v434 = verf.f32.pop %v418
    %v435 = verf.f32.pop %v419
    %v436 = verf.f32.pop %v420
    %v437 = vadd.f32 %v421, 1.0
    %v438 = vadd.f32 %v422, 1.0
    %v439 = vadd.f32 %v423, 1.0
    %v440 = vadd.f32 %v424, 1.0
    %v441 = vadd.f32 %v425, 1.0
    %v442 = vadd.f32 %v426, 1.0
    %v443 = vadd.f32 %v427, 1.0
    %v444 = vadd.f32 %v428, 1.0
    %v445 = vadd.f32 %v429, 1.0
    %v446 = vadd.f32 %v430, 1.0
    %v447 = vadd.f32 %v431, 1.0
    %v448 = vadd.f32 %v432, 1.0
    %v449 = vadd.f32 %v433, 1.0
    %v450 = vadd.f32 %v434, 1.0
    %v451 = vadd.f32 %v435, 1.0
    %v452 = vadd.f32 %v436, 1.0
    %v453 = vmul.f32 %v389, %v437
    %v454 = vmul.f32 %v390, %v438
    %v455 = vmul.f32 %v391, %v439
    %v456 = vmul.f32 %v392, %v440
    %v457 = vmul.f32 %v393, %v441
    %v458 = vmul.f32 %v394, %v442
    %v459 = vmul.f32 %v395, %v443
    %v460 = vmul.f32 %v396, %v444
    %v461 = vmul.f32 %v397, %v445
    %v462 = vmul.f32 %v398, %v446
    %v463 = vmul.f32 %v399, %v447
    %v464 = vmul.f32 %v400, %v448
    %v465 = vmul.f32 %v401, %v449
    %v466 = vmul.f32 %v402, %v450
    %v467 = vmul.f32 %v403, %v451
    %v468 = vmul.f32 %v404, %v452
    %v469 = vpack.c.bf16 %v457, %v453
    %v470 = vpack.c.bf16 %v458, %v454
    %v471 = vpack.c.bf16 %v459, %v455
    %v472 = vpack.c.bf16 %v460, %v456
    %v473 = vpack.c.bf16 %v465, %v461
    %v474 = vpack.c.bf16 %v466, %v462
    %v475 = vpack.c.bf16 %v467, %v463
    %v476 = vpack.c.bf16 %v468, %v464
    %v477 = vld [vmem:[#allocation7] sm:$0xf]
    %v478 = vld [vmem:[#allocation7 + $0x4] sm:$0xf]
    %v479 = vld [vmem:[#allocation7 + $0x8] sm:$0xf]
    %v480 = vld [vmem:[#allocation7 + $0xc] sm:$0xf]
    %v481 = vld [vmem:[#allocation7 + $0x10] sm:$0xf]
    %v482 = vld [vmem:[#allocation7 + $0x14] sm:$0xf]
    %v483 = vld [vmem:[#allocation7 + $0x18] sm:$0xf]
    %v484 = vld [vmem:[#allocation7 + $0x1c] sm:$0xf]
    %v485 = vld [vmem:[#allocation7 + $0x20] sm:$0xf]
    %v486 = vld [vmem:[#allocation7 + $0x24] sm:$0xf]
    %v487 = vld [vmem:[#allocation7 + $0x28] sm:$0xf]
    %v488 = vld [vmem:[#allocation7 + $0x2c] sm:$0xf]
    %v489 = vld [vmem:[#allocation7 + $0x30] sm:$0xf]
    %v490 = vld [vmem:[#allocation7 + $0x34] sm:$0xf]
    %v491 = vld [vmem:[#allocation7 + $0x38] sm:$0xf]
    %v492 = vld [vmem:[#allocation7 + $0x3c] sm:$0xf]
    %v493 = vld [vmem:[#allocation7 + $0x40] sm:$0xf]
    %v494 = vld [vmem:[#allocation7 + $0x44] sm:$0xf]
    %v495 = vld [vmem:[#allocation7 + $0x48] sm:$0xf]
    %v496 = vld [vmem:[#allocation7 + $0x4c] sm:$0xf]
    %v497 = vld [vmem:[#allocation7 + $0x50] sm:$0xf]
    %v498 = vld [vmem:[#allocation7 + $0x54] sm:$0xf]
    %v499 = vld [vmem:[#allocation7 + $0x58] sm:$0xf]
    %v500 = vld [vmem:[#allocation7 + $0x5c] sm:$0xf]
    %v501 = vld [vmem:[#allocation7 + $0x60] sm:$0xf]
    %v502 = vld [vmem:[#allocation7 + $0x64] sm:$0xf]
    %v503 = vld [vmem:[#allocation7 + $0x68] sm:$0xf]
    %v504 = vld [vmem:[#allocation7 + $0x6c] sm:$0xf]
    %v505 = vld [vmem:[#allocation7 + $0x70] sm:$0xf]
    %v506 = vld [vmem:[#allocation7 + $0x74] sm:$0xf]
    %v507 = vld [vmem:[#allocation7 + $0x78] sm:$0xf]
    %v508 = vld [vmem:[#allocation7 + $0x7c] sm:$0xf]
    %v509 = vld [vmem:[#allocation7 + $0x80] sm:$0xf]
    %v510 = vld [vmem:[#allocation7 + $0x84] sm:$0xf]
    %v511 = vld [vmem:[#allocation7 + $0x88] sm:$0xf]
    %v512 = vld [vmem:[#allocation7 + $0x8c] sm:$0xf]
    %v513 = vld [vmem:[#allocation7 + $0x90] sm:$0xf]
    %v514 = vld [vmem:[#allocation7 + $0x94] sm:$0xf]
    %v515 = vld [vmem:[#allocation7 + $0x98] sm:$0xf]
    %v516 = vld [vmem:[#allocation7 + $0x9c] sm:$0xf]
    %v517 = vld [vmem:[#allocation7 + $0xa0] sm:$0xf]
    %v518 = vld [vmem:[#allocation7 + $0xa4] sm:$0xf]
    %v519 = vld [vmem:[#allocation7 + $0xa8] sm:$0xf]
    %v520 = vld [vmem:[#allocation7 + $0xac] sm:$0xf]
    %v521 = vld [vmem:[#allocation7 + $0xb0] sm:$0xf]
    %v522 = vld [vmem:[#allocation7 + $0xb4] sm:$0xf]
    %v523 = vld [vmem:[#allocation7 + $0xb8] sm:$0xf]
    %v524 = vld [vmem:[#allocation7 + $0xbc] sm:$0xf]
    %v525 = vld [vmem:[#allocation7 + $0xc0] sm:$0xf]
    %v526 = vld [vmem:[#allocation7 + $0xc4] sm:$0xf]
    %v527 = vld [vmem:[#allocation7 + $0xc8] sm:$0xf]
    %v528 = vld [vmem:[#allocation7 + $0xcc] sm:$0xf]
    %v529 = vld [vmem:[#allocation7 + $0xd0] sm:$0xf]
    %v530 = vld [vmem:[#allocation7 + $0xd4] sm:$0xf]
    %v531 = vld [vmem:[#allocation7 + $0xd8] sm:$0xf]
    %v532 = vld [vmem:[#allocation7 + $0xdc] sm:$0xf]
    %v533 = vld [vmem:[#allocation7 + $0xe0] sm:$0xf]
    %v534 = vld [vmem:[#allocation7 + $0xe4] sm:$0xf]
    %v535 = vld [vmem:[#allocation7 + $0xe8] sm:$0xf]
    %v536 = vld [vmem:[#allocation7 + $0xec] sm:$0xf]
    %v537 = vld [vmem:[#allocation7 + $0xf0] sm:$0xf]
    %v538 = vld [vmem:[#allocation7 + $0xf4] sm:$0xf]
    %v539 = vld [vmem:[#allocation7 + $0xf8] sm:$0xf]
    %v540 = vld [vmem:[#allocation7 + $0xfc] sm:$0xf]
    %v541 = vld [vmem:[%s4] sm:$0x1]
    %v543 = vlaneseq
    %v544 = vshrl.u32 %v543, 7
    %v545 = vsub.s32 0, %v544
    %v546 = vrot.slane %v541, %v545
    %v612 = vunpack.c.l.b16 %v477
    %v613 = vunpack.c.l.b16 %v478
    %v614 = vunpack.c.l.b16 %v479
    %v615 = vunpack.c.l.b16 %v480
    %v616 = vunpack.c.l.b16 %v481
    %v617 = vunpack.c.l.b16 %v482
    %v618 = vunpack.c.l.b16 %v483
    %v619 = vunpack.c.l.b16 %v484
    %v620 = vunpack.c.l.b16 %v485
    %v621 = vunpack.c.l.b16 %v486
    %v622 = vunpack.c.l.b16 %v487
    %v623 = vunpack.c.l.b16 %v488
    %v624 = vunpack.c.l.b16 %v489
    %v625 = vunpack.c.l.b16 %v490
    %v626 = vunpack.c.l.b16 %v491
    %v627 = vunpack.c.l.b16 %v492
    %v628 = vunpack.c.l.b16 %v493
    %v629 = vunpack.c.l.b16 %v494
    %v630 = vunpack.c.l.b16 %v495
    %v631 = vunpack.c.l.b16 %v496
    %v632 = vunpack.c.l.b16 %v497
    %v633 = vunpack.c.l.b16 %v498
    %v634 = vunpack.c.l.b16 %v499
    %v635 = vunpack.c.l.b16 %v500
    %v636 = vunpack.c.l.b16 %v501
    %v637 = vunpack.c.l.b16 %v502
    %v638 = vunpack.c.l.b16 %v503
    %v639 = vunpack.c.l.b16 %v504
    %v640 = vunpack.c.l.b16 %v505
    %v641 = vunpack.c.l.b16 %v506
    %v642 = vunpack.c.l.b16 %v507
    %v643 = vunpack.c.l.b16 %v508
    %v644 = vunpack.c.l.b16 %v509
    %v645 = vunpack.c.l.b16 %v510
    %v646 = vunpack.c.l.b16 %v511
    %v647 = vunpack.c.l.b16 %v512
    %v648 = vunpack.c.l.b16 %v513
    %v649 = vunpack.c.l.b16 %v514
    %v650 = vunpack.c.l.b16 %v515
    %v651 = vunpack.c.l.b16 %v516
    %v652 = vunpack.c.l.b16 %v517
    %v653 = vunpack.c.l.b16 %v518
    %v654 = vunpack.c.l.b16 %v519
    %v655 = vunpack.c.l.b16 %v520
    %v656 = vunpack.c.l.b16 %v521
    %v657 = vunpack.c.l.b16 %v522
    %v658 = vunpack.c.l.b16 %v523
    %v659 = vunpack.c.l.b16 %v524
    %v660 = vunpack.c.l.b16 %v525
    %v661 = vunpack.c.l.b16 %v526
    %v662 = vunpack.c.l.b16 %v527
    %v663 = vunpack.c.l.b16 %v528
    %v664 = vunpack.c.l.b16 %v529
    %v665 = vunpack.c.l.b16 %v530
    %v666 = vunpack.c.l.b16 %v531
    %v667 = vunpack.c.l.b16 %v532
    %v668 = vunpack.c.l.b16 %v533
    %v669 = vunpack.c.l.b16 %v534
    %v670 = vunpack.c.l.b16 %v535
    %v671 = vunpack.c.l.b16 %v536
    %v672 = vunpack.c.l.b16 %v537
    %v673 = vunpack.c.l.b16 %v538
    %v674 = vunpack.c.l.b16 %v539
    %v675 = vunpack.c.l.b16 %v540
    %v676 = vpack.c.b16 %v613, %v612
    %v677 = vpack.c.b16 %v615, %v614
    %v678 = vpack.c.b16 %v617, %v616
    %v679 = vpack.c.b16 %v619, %v618
    %v680 = vpack.c.b16 %v621, %v620
    %v681 = vpack.c.b16 %v623, %v622
    %v682 = vpack.c.b16 %v625, %v624
    %v683 = vpack.c.b16 %v627, %v626
    %v684 = vpack.c.b16 %v629, %v628
    %v685 = vpack.c.b16 %v631, %v630
    %v686 = vpack.c.b16 %v633, %v632
    %v687 = vpack.c.b16 %v635, %v634
    %v688 = vpack.c.b16 %v637, %v636
    %v689 = vpack.c.b16 %v639, %v638
    %v690 = vpack.c.b16 %v641, %v640
    %v691 = vpack.c.b16 %v643, %v642
    %v692 = vpack.c.b16 %v645, %v644
    %v693 = vpack.c.b16 %v647, %v646
    %v694 = vpack.c.b16 %v649, %v648
    %v695 = vpack.c.b16 %v651, %v650
    %v696 = vpack.c.b16 %v653, %v652
    %v697 = vpack.c.b16 %v655, %v654
    %v698 = vpack.c.b16 %v657, %v656
    %v699 = vpack.c.b16 %v659, %v658
    %v700 = vpack.c.b16 %v661, %v660
    %v701 = vpack.c.b16 %v663, %v662
    %v702 = vpack.c.b16 %v665, %v664
    %v703 = vpack.c.b16 %v667, %v666
    %v704 = vpack.c.b16 %v669, %v668
    %v705 = vpack.c.b16 %v671, %v670
    %v706 = vpack.c.b16 %v673, %v672
    %v707 = vpack.c.b16 %v675, %v674
    %740 = vmatprep.subr.bf16.mxu0 0
    %741 = vmatpush1.bf16.msra.mxu0 %v676
    %742 = vmatprep.subr.bf16.mxu0 0
    %743 = vmatpush1.bf16.msra.mxu0 %v677
    %744 = vmatprep.subr.bf16.mxu0 0
    %745 = vmatpush1.bf16.msra.mxu0 %v678
    %746 = vmatprep.subr.bf16.mxu0 0
    %747 = vmatpush1.bf16.msra.mxu0 %v679
    %748 = vmatprep.subr.bf16.mxu0 0
    %749 = vmatpush1.bf16.msra.mxu0 %v680
    %750 = vmatprep.subr.bf16.mxu0 0
    %751 = vmatpush1.bf16.msra.mxu0 %v681
    %752 = vmatprep.subr.bf16.mxu0 0
    %753 = vmatpush1.bf16.msra.mxu0 %v682
    %754 = vmatprep.subr.bf16.mxu0 0
    %755 = vmatpush1.bf16.msra.mxu0 %v683
    %756 = vmatprep.subr.bf16.mxu0 0
    %757 = vmatpush1.bf16.msra.mxu0 %v684
    %758 = vmatprep.subr.bf16.mxu0 0
    %759 = vmatpush1.bf16.msra.mxu0 %v685
    %760 = vmatprep.subr.bf16.mxu0 0
    %761 = vmatpush1.bf16.msra.mxu0 %v686
    %762 = vmatprep.subr.bf16.mxu0 0
    %763 = vmatpush1.bf16.msra.mxu0 %v687
    %764 = vmatprep.subr.bf16.mxu0 0
    %765 = vmatpush1.bf16.msra.mxu0 %v688
    %766 = vmatprep.subr.bf16.mxu0 0
    %767 = vmatpush1.bf16.msra.mxu0 %v689
    %768 = vmatprep.subr.bf16.mxu0 0
    %769 = vmatpush1.bf16.msra.mxu0 %v690
    %770 = vmatprep.subr.bf16.mxu0 0
    %771 = vmatpush1.bf16.msra.mxu0 %v691
    %772 = vmatprep.mubr.bf16.mxu0 %v470
    %773 = vmatmul.mubr.bf16.gmra.mrb[0].mxu0 %v469
    %v774 = vpop.f32.mrb[0].mxu0
    %v775 = vadd.f32 %v546, %v774
    %v776 = vpop.f32.mrb[0].mxu0
    %v777 = vpop.f32.mrb[0].mxu0
    %v778 = vadd.f32 %v546, %v777
    %v779 = vpop.f32.mrb[0].mxu0
    %780 = vmatprep.mubr.bf16.mxu0 %v474
    %781 = vmatmul.mubr.bf16.gmra.mrb[0].mxu0 %v473
    %v782 = vpop.f32.mrb[0].mxu0
    %v783 = vadd.f32 %v546, %v782
    %v784 = vpop.f32.mrb[0].mxu0
    %v785 = vpop.f32.mrb[0].mxu0
    %v786 = vadd.f32 %v546, %v785
    %v787 = vpop.f32.mrb[0].mxu0
    %788 = vdwg.mxu0
    %789 = vmatprep.subr.bf16.mxu0 0
    %790 = vmatpush1.bf16.msra.mxu0 %v692
    %791 = vmatprep.subr.bf16.mxu0 0
    %792 = vmatpush1.bf16.msra.mxu0 %v693
    %793 = vmatprep.subr.bf16.mxu0 0
    %794 = vmatpush1.bf16.msra.mxu0 %v694
    %795 = vmatprep.subr.bf16.mxu0 0
    %796 = vmatpush1.bf16.msra.mxu0 %v695
    %797 = vmatprep.subr.bf16.mxu0 0
    %798 = vmatpush1.bf16.msra.mxu0 %v696
    %799 = vmatprep.subr.bf16.mxu0 0
    %800 = vmatpush1.bf16.msra.mxu0 %v697
    %801 = vmatprep.subr.bf16.mxu0 0
    %802 = vmatpush1.bf16.msra.mxu0 %v698
    %803 = vmatprep.subr.bf16.mxu0 0
    %804 = vmatpush1.bf16.msra.mxu0 %v699
    %805 = vmatprep.subr.bf16.mxu0 0
    %806 = vmatpush1.bf16.msra.mxu0 %v700
    %807 = vmatprep.subr.bf16.mxu0 0
    %808 = vmatpush1.bf16.msra.mxu0 %v701
    %809 = vmatprep.subr.bf16.mxu0 0
    %810 = vmatpush1.bf16.msra.mxu0 %v702
    %811 = vmatprep.subr.bf16.mxu0 0
    %812 = vmatpush1.bf16.msra.mxu0 %v703
    %813 = vmatprep.subr.bf16.mxu0 0
    %814 = vmatpush1.bf16.msra.mxu0 %v704
    %815 = vmatprep.subr.bf16.mxu0 0
    %816 = vmatpush1.bf16.msra.mxu0 %v705
    %817 = vmatprep.subr.bf16.mxu0 0
    %818 = vmatpush1.bf16.msra.mxu0 %v706
    %819 = vmatprep.subr.bf16.mxu0 0
    %820 = vmatpush1.bf16.msra.mxu0 %v707
    %821 = vmatprep.mubr.bf16.mxu0 %v472
    %822 = vmatmul.mubr.bf16.gmra.mrb[0].mxu0 %v471
    %v823 = vpop.f32.mrb[0].mxu0
    %v824 = vadd.f32 %v775, %v823
    %v825 = vpop.f32.mrb[0].mxu0
    %v826 = vpop.f32.mrb[0].mxu0
    %v827 = vadd.f32 %v778, %v826
    %v828 = vpop.f32.mrb[0].mxu0
    %829 = vmatprep.mubr.bf16.mxu0 %v476
    %830 = vmatmul.mubr.bf16.gmra.mrb[0].mxu0 %v475
    %v831 = vpop.f32.mrb[0].mxu0
    %v832 = vadd.f32 %v783, %v831
    %v833 = vpop.f32.mrb[0].mxu0
    %v834 = vpop.f32.mrb[0].mxu0
    %v835 = vadd.f32 %v786, %v834
    %v836 = vpop.f32.mrb[0].mxu0
    %837 = vdwg.mxu0
    %838 = vst [vmem:[#allocation8] sm:$0xff] %v824
    %839 = vst [vmem:[#allocation8 + $0x8] sm:$0xff] %v827
    %840 = vst [vmem:[#allocation8 + $0x10] sm:$0xff] %v832
    %841 = vst [vmem:[#allocation8 + $0x18] sm:$0xff] %v835
    // Predicated region
    $region34: #{tpu_custom_call.1} parent=1 // pred_check
      _
    $region35: #{tpu_custom_call.1} parent=1 // pred_check_branch
      %843 = sbr.rel (0) target = $region37
    $region36: #{tpu_custom_call.1} parent=1 // pred_region
      %s845 = ssub.s32 512, 512
      %846 = vsyncadd [#allocation4], %s845
      %s847 = sshll.u32 [#allocation8], 4
      %s848 = int_to_ptr.vmem [resolvable:$true] %s847
      %853 = dma.vmem_to_hbm [thread:$0]  %s848, 512, %s5, [#allocation4], 128, 128, 8
    $region37: #{tpu_custom_call.1} parent=1 // pred_fallthru
      _
    // Predicated region
    $region38: #{tpu_custom_call.1} parent=1 // pred_check
      _
    $region39: #{tpu_custom_call.1} parent=1 // pred_check_branch
      %855 = sbr.rel (0) target = $region41
    $region40: #{tpu_custom_call.1} parent=1 // pred_region
      %856 = dma.done [#allocation4], 512
    $region41: #{tpu_custom_call.1} parent=1 // pred_fallthru
      _
    %857 = vsyncpa [#allocation3], 1
    %858 = vsyncpa [#allocation6], 1
    %859 = vsyncpa [#allocation4], 1

</llo_original>
